<compile_context>
chip_gen: v7x
topology: tpu7x:2x2x1
jax: 0.10.0
libtpu: 0.0.40
codegen_flags: <defaults>
</compile_context>

<pallas_src>
import jax
import jax.numpy as jnp
from jax import lax
from jax.experimental import pallas as pl
from jax.experimental.pallas import tpu as pltpu

LANE = 128      # vreg lane width
SUBLANE = 8     # vreg sublane count (f32)


def _round_up(x, m):
    return (x + m - 1) // m * m


def _round_down(x, m):
    return (x // m) * m


def _vmem_capacity_bytes():
    try:
        return int(pltpu.get_tpu_info().vmem_capacity_bytes)
    except Exception:
        return 64 * 1024 * 1024  # conservative: v7x per-TC VMEM


def cond_linear_kernel(t_ref, x_ref, w_ref, b_ref, e_ref, o_ref):
    # Per batch tile:
    #   t_ref: (TB, 1)    int32   streamed  (4 B/row HBM traffic)
    #   x_ref: (TB, K)    f32     streamed  (cast to MXU dtype in-kernel)
    #   w_ref: (K, Np)    f32/bf16 resident  (W^T, lane padded)
    #   b_ref: (1, Np)    f32     resident
    #   e_ref: (NSp, Np)  f32     resident embedding table (sublane padded)
    #   o_ref: (TB, Np)   f32     lane-dense -> unmasked vst
    lin = jnp.dot(x_ref[...].astype(w_ref.dtype), w_ref[...],
                  preferred_element_type=jnp.float32)

    # In-kernel gamma gather via aligned one-hot MXU matmul (no HBM gamma).
    tb = t_ref.shape[0]
    ns = e_ref.shape[0]
    onehot = (t_ref[...] ==
              lax.broadcasted_iota(jnp.int32, (tb, ns), 1)).astype(jnp.float32)
    gamma = jnp.dot(onehot, e_ref[...], preferred_element_type=jnp.float32)

    o_ref[...] = (gamma * (lin + b_ref[...])).astype(o_ref.dtype)


def prepare_params(lin_w, lin_b, embed_w, compute_dtype=jnp.bfloat16):
    """One-time parameter layout prep (do NOT call per forward).

    lin_w:   (num_out, num_in)  nn.Linear weight
    lin_b:   (num_out,)         nn.Linear bias
    embed_w: (n_steps, num_out) nn.Embedding weight
    Returns (w_t, b2, emb_pad, num_out):
      w_t     : (num_in, n_pad)   compute_dtype, W^T lane-padded (zero cols)
      b2      : (1, n_pad)        f32
      emb_pad : (ns_pad, n_pad)   f32, n_steps padded to a sublane multiple
    compute_dtype=bf16 (default) halves weight residency and feeds the MXU
    natively on v5e/v6e/v7x; use f32 for bit-tighter numerics.
    """
    num_out, num_in = lin_w.shape
    n_steps = embed_w.shape[0]
    n_pad = _round_up(max(num_out, LANE), LANE)
    ns_pad = _round_up(max(n_steps, SUBLANE), SUBLANE)

    w_t = jnp.zeros((num_in, n_pad), compute_dtype)
    w_t = w_t.at[:, :num_out].set(lin_w.T.astype(compute_dtype))
    b2 = jnp.zeros((1, n_pad), jnp.float32).at[:, :num_out].set(lin_b)
    emb_pad = (jnp.zeros((ns_pad, n_pad), jnp.float32)
               .at[:n_steps, :num_out].set(embed_w))
    return w_t, b2, emb_pad, num_out


def conditional_linear(x, t, w_t, b2, emb_pad, num_out, *, tile_b=2048):
    """x: (B, num_in) f32, t: (B,) int, params from prepare_params.
    Returns (B, num_out) f32 == embed(t) * (x @ W^T + b)."""
    B, num_in = x.shape
    n_pad = w_t.shape[1]
    ns_pad = emb_pad.shape[0]
    w_itemsize = jnp.dtype(w_t.dtype).itemsize
    x_itemsize = jnp.dtype(x.dtype).itemsize

    # ---- batch-tile sizing from the VMEM budget (double-buffered figures) ----
    vmem_cap = _vmem_capacity_bytes()
    budget = (3 * vmem_cap) // 4
    resident = 2 * (num_in * n_pad * w_itemsize      # W^T
                    + ns_pad * n_pad * 4             # embedding table
                    + n_pad * 4)                     # bias
    per_row = 2 * (num_in * x_itemsize + 4 + n_pad * 4)   # x + t + out
    fit_rows = max(_round_down(max(budget - resident, 0) // per_row, SUBLANE),
                   SUBLANE)
    tile_b = max(min(_round_up(tile_b, SUBLANE), fit_rows), SUBLANE)

    # ---- balanced tiling (padding at most a few rows), >=2 tiles for v7x ----
    B8 = _round_up(B, SUBLANE)
    n_tiles = pl.cdiv(B8, tile_b)
    if B8 >= 2 * SUBLANE:          # non-trivial batch: let both TCs work
        n_tiles = max(n_tiles, 2)
    b_tile = _round_up(pl.cdiv(B8, n_tiles), SUBLANE)
    b_padded = b_tile * n_tiles

    t2 = t.astype(jnp.int32).reshape(B, 1)
    if b_padded != B:
        x = jnp.zeros((b_padded, num_in), x.dtype).at[:B].set(x)
        t2 = jnp.zeros((b_padded, 1), jnp.int32).at[:B].set(t2)

    cost = pl.CostEstimate(
        flops=(2 * b_padded * num_in * n_pad          # main matmul
               + 2 * b_padded * ns_pad * n_pad        # one-hot gamma matmul
               + 2 * b_padded * n_pad),               # bias + modulation
        transcendentals=0,
        bytes_accessed=(b_padded * num_in * x_itemsize   # x
                        + b_padded * 4                   # t
                        + num_in * n_pad * w_itemsize    # W^T
                        + ns_pad * n_pad * 4             # embedding table
                        + n_pad * 4                      # bias
                        + b_padded * n_pad * 4),         # out
    )

    vmem_limit = int(min((3 * vmem_cap) // 4, 96 * 1024 * 1024))

    out = pl.pallas_call(
        cond_linear_kernel,
        out_shape=jax.ShapeDtypeStruct((b_padded, n_pad), jnp.float32),
        grid_spec=pltpu.PrefetchScalarGridSpec(
            num_scalar_prefetch=0,
            grid=(n_tiles,),
            in_specs=[
                pl.BlockSpec((b_tile, 1), lambda i: (i, 0)),        # t   (stream)
                pl.BlockSpec((b_tile, num_in), lambda i: (i, 0)),   # x   (stream)
                pl.BlockSpec((num_in, n_pad), lambda i: (0, 0)),    # W^T (resident)
                pl.BlockSpec((1, n_pad), lambda i: (0, 0)),         # bias(resident)
                pl.BlockSpec((ns_pad, n_pad), lambda i: (0, 0)),    # emb (resident)
            ],
            out_specs=pl.BlockSpec((b_tile, n_pad), lambda i: (i, 0)),
        ),
        compiler_params=pltpu.CompilerParams(
            dimension_semantics=("parallel",),   # batch split across v7x TCs
            vmem_limit_bytes=vmem_limit,
        ),
        cost_estimate=cost,
    )(t2, x, w_t, b2, emb_pad)

    if b_padded == B and n_pad == num_out:
        return out                     # lane-dense slab, no padding to strip
    return out[:B, :num_out]


if __name__ == "__main__":
    # Small shapes consistent with the module's forward pass.
    B, num_in, num_out, n_steps = 8, 32, 32, 10

    key = jax.random.PRNGKey(0)
    kx, kw, kb, ke, kt = jax.random.split(key, 5)

    # Deterministic parameter init (shapes from __init__):
    #   lin.weight: (num_out, num_in), lin.bias: (num_out,)
    #   embed.weight: (n_steps, num_out) ~ U[0,1)
    bound = 1.0 / (num_in ** 0.5)
    lin_w = jax.random.uniform(kw, (num_out, num_in), jnp.float32, -bound, bound)
    lin_b = jax.random.uniform(kb, (num_out,), jnp.float32, -bound, bound)
    embed_w = jax.random.uniform(ke, (n_steps, num_out), jnp.float32, 0.0, 1.0)

    x = jax.random.normal(kx, (B, num_in), jnp.float32)
    t = jax.random.randint(kt, (B,), 0, n_steps, jnp.int32)
    ref = embed_w[t] * (x @ lin_w.T + lin_b)

    # f32 operand path: tight numerical check (single-tile grid).
    w_t, b2, emb_pad, nout = prepare_params(lin_w, lin_b, embed_w,
                                            compute_dtype=jnp.float32)
    out = jax.block_until_ready(conditional_linear(x, t, w_t, b2, emb_pad, nout))
    assert out.shape == (B, num_out)
    assert jnp.allclose(out, ref, atol=1e-4, rtol=1e-4), "mismatch (f32, 1 tile)"

    # Multi-tile (grid) path on a larger batch, still f32.
    B2 = 64
    kx2, kt2 = jax.random.split(jax.random.PRNGKey(1), 2)
    x2 = jax.random.normal(kx2, (B2, num_in), jnp.float32)
    t2 = jax.random.randint(kt2, (B2,), 0, n_steps, jnp.int32)
    ref2 = embed_w[t2] * (x2 @ lin_w.T + lin_b)
    out2 = jax.block_until_ready(
        conditional_linear(x2, t2, w_t, b2, emb_pad, nout, tile_b=32))
    assert out2.shape == (B2, num_out)
    assert jnp.allclose(out2, ref2, atol=1e-4, rtol=1e-4), "mismatch (f32, tiled)"

    # Default bf16 operand path (MXU-native); looser tolerance — expected
    # precision change from bf16 operand rounding, accumulation stays f32.
    w_tb, b2b, emb_padb, _ = prepare_params(lin_w, lin_b, embed_w)
    out3 = jax.block_until_ready(
        conditional_linear(x2, t2, w_tb, b2b, emb_padb, nout))
    assert out3.shape == (B2, num_out)
    assert jnp.allclose(out3, ref2, atol=5e-2, rtol=5e-2), "mismatch (bf16)"

    print("KERNEL_OK")
</pallas_src>

<mosaic_0001>
module attributes {stable_mosaic.version = 11 : i64} {
  func.func @cond_linear_kernel(%arg0: i32, %arg1: memref<8x1xi32, #tpu.memory_space<vmem>>, %arg2: memref<8x32xf32, #tpu.memory_space<vmem>>, %arg3: memref<32x128xf32, #tpu.memory_space<vmem>>, %arg4: memref<1x128xf32, #tpu.memory_space<vmem>>, %arg5: memref<16x128xf32, #tpu.memory_space<vmem>>, %arg6: memref<8x128xf32, #tpu.memory_space<vmem>>) attributes {dimension_semantics = [#tpu.dimension_semantics<parallel>], iteration_bounds = array<i64: 1>, scalar_prefetch = 0 : i64, scratch_operands = 0 : i64, tpu.core_type = #tpu.core_type<tc>, window_params = [{transform_indices = @transform_0, window_bounds = array<i64: 8, 1>}, {transform_indices = @transform_1, window_bounds = array<i64: 8, 32>}, {pipeline_mode = #tpu.pipeline_mode<synchronous>, transform_indices = @transform_2, window_bounds = array<i64: 32, 128>}, {pipeline_mode = #tpu.pipeline_mode<synchronous>, transform_indices = @transform_3, window_bounds = array<i64: 1, 128>}, {pipeline_mode = #tpu.pipeline_mode<synchronous>, transform_indices = @transform_4, window_bounds = array<i64: 16, 128>}, {transform_indices = @transform_5, window_bounds = array<i64: 8, 128>}]} {
    %c0 = arith.constant 0 : index
    %c0_0 = arith.constant 0 : index
    %0 = vector.load %arg2[%c0, %c0_0] : memref<8x32xf32, #tpu.memory_space<vmem>>, vector<8x32xf32>
    %c0_1 = arith.constant 0 : index
    %c0_2 = arith.constant 0 : index
    %1 = vector.load %arg3[%c0_1, %c0_2] : memref<32x128xf32, #tpu.memory_space<vmem>>, vector<32x128xf32>
    %cst = arith.constant dense<0.000000e+00> : vector<8x128xf32>
    %2 = tpu.matmul %0, %1, %cst {dimension_numbers = #tpu.dot_dimension_numbers<[1], [0], [0], [1], [0, 0, 1, 1], [], []>} : vector<8x32xf32>, vector<32x128xf32>, vector<8x128xf32> -> vector<8x128xf32>
    %c0_3 = arith.constant 0 : index
    %c0_4 = arith.constant 0 : index
    %3 = vector.load %arg1[%c0_3, %c0_4] : memref<8x1xi32, #tpu.memory_space<vmem>>, vector<8x1xi32>
    %4 = tpu.iota {dimensions = array<i32: 1>} : vector<8x16xi32>
    %5 = vector.broadcast %3 : vector<8x1xi32> to vector<8x16xi32>
    %6 = arith.cmpi eq, %5, %4 : vector<8x16xi32>
    %7 = arith.extui %6 : vector<8x16xi1> to vector<8x16xi32>
    %8 = arith.sitofp %7 : vector<8x16xi32> to vector<8x16xf32>
    %c0_5 = arith.constant 0 : index
    %c0_6 = arith.constant 0 : index
    %9 = vector.load %arg5[%c0_5, %c0_6] : memref<16x128xf32, #tpu.memory_space<vmem>>, vector<16x128xf32>
    %cst_7 = arith.constant dense<0.000000e+00> : vector<8x128xf32>
    %10 = tpu.matmul %8, %9, %cst_7 {dimension_numbers = #tpu.dot_dimension_numbers<[1], [0], [0], [1], [0, 0, 1, 1], [], []>} : vector<8x16xf32>, vector<16x128xf32>, vector<8x128xf32> -> vector<8x128xf32>
    %c0_8 = arith.constant 0 : index
    %c0_9 = arith.constant 0 : index
    %11 = vector.load %arg4[%c0_8, %c0_9] : memref<1x128xf32, #tpu.memory_space<vmem>>, vector<1x128xf32>
    %12 = vector.broadcast %11 : vector<1x128xf32> to vector<8x128xf32>
    %13 = arith.addf %2, %12 : vector<8x128xf32>
    %14 = arith.mulf %10, %13 : vector<8x128xf32>
    %c0_10 = arith.constant 0 : index
    %c0_11 = arith.constant 0 : index
    %15 = vector.load %arg6[%c0_10, %c0_11] : memref<8x128xf32, #tpu.memory_space<vmem>>, vector<8x128xf32>
    tpu.vector_store %arg6[%c0_10, %c0_11], %14 {strides = array<i32>} : memref<8x128xf32, #tpu.memory_space<vmem>>, vector<8x128xf32>,
    return
  }
  func.func @transform_0(%arg0: i32) -> (i32, i32) {
    %c0_i32 = arith.constant 0 : i32
    %c0_i32_0 = arith.constant 0 : i32
    return %arg0, %c0_i32 : i32, i32
  }
  func.func @transform_1(%arg0: i32) -> (i32, i32) {
    %c0_i32 = arith.constant 0 : i32
    %c0_i32_0 = arith.constant 0 : i32
    return %arg0, %c0_i32 : i32, i32
  }
  func.func @transform_2(%arg0: i32) -> (i32, i32) {
    %c0_i32 = arith.constant 0 : i32
    %c0_i32_0 = arith.constant 0 : i32
    %c0_i32_1 = arith.constant 0 : i32
    return %c0_i32, %c0_i32_0 : i32, i32
  }
  func.func @transform_3(%arg0: i32) -> (i32, i32) {
    %c0_i32 = arith.constant 0 : i32
    %c0_i32_0 = arith.constant 0 : i32
    %c0_i32_1 = arith.constant 0 : i32
    return %c0_i32, %c0_i32_0 : i32, i32
  }
  func.func @transform_4(%arg0: i32) -> (i32, i32) {
    %c0_i32 = arith.constant 0 : i32
    %c0_i32_0 = arith.constant 0 : i32
    %c0_i32_1 = arith.constant 0 : i32
    return %c0_i32, %c0_i32_0 : i32, i32
  }
  func.func @transform_5(%arg0: i32) -> (i32, i32) {
    %c0_i32 = arith.constant 0 : i32
    %c0_i32_0 = arith.constant 0 : i32
    return %arg0, %c0_i32 : i32, i32
  }
}

</mosaic_0001>

<llo_original>
// kernel: tpu_custom_call.1
$region0: #{tpu_custom_call.1}
  #allocation0 [shape = 'u32[]', space=smem, size = 0x4, offset = 0x4, fixed_abs, tag = 'smem constant byte address 0x4 - core index']
  #allocation1 [shape = 'u32[144,128]{1,0:T(1,128)}', space=vmem, size = 0x12000, scoped, tag = 'internal scratch']
  %s0 = inlined_call_operand.vmem [shape: s32[8,1], index: 0, kind: input, shape index: {}]
  %s1 = inlined_call_operand.vmem [shape: f32[8,32], index: 1, kind: input, shape index: {}]
  %s2 = inlined_call_operand.hbm [shape: f32[32,128], index: 2, kind: input, shape index: {}]
  %s3 = inlined_call_operand.hbm [shape: f32[1,128], index: 3, kind: input, shape index: {}]
  %s4 = inlined_call_operand.vmem [shape: f32[16,128], index: 4, kind: input, shape index: {}]
  %s5 = inlined_call_operand.hbm [shape: f32[8,128], index: 5, kind: output, shape index: {}]
  %s6 = sld [smem:[#allocation0]]
  $region38: #{tpu_custom_call.1} parent=0
    _
  %s8 = ssub.s32 1, %s6
  %s9 = scalar_select 0, %s8, %s6
  $region1: #{tpu_custom_call.1} parent=0
    #allocation2 [shape = 'u8[16384]{0}', space=vmem, size = 0x4000, scoped, tag = 'input window, operand 2, single buffered']
    #allocation3 [shape = 's32[1]{0}', space=sflag, size = 0x4, scoped, tag = 'scoped memory for tpu_custom_call.1']
    #allocation4 [shape = 's32[1]{0}', space=sflag, size = 0x4, scoped, tag = 'scoped memory for tpu_custom_call.1']
    #allocation5 [shape = 'u8[512]{0}', space=vmem, size = 0x400, scoped, tag = 'input window, operand 3, single buffered']
    #allocation6 [shape = 's32[1]{0}', space=sflag, size = 0x4, scoped, tag = 'scoped memory for tpu_custom_call.1']
    #allocation7 [shape = 'u8[4096]{0}', space=vmem, size = 0x1000, scoped, tag = 'output window, operand 0, single buffered']
    %10 = vsyncpa [#allocation3], 0
    %11 = vsyncpa [#allocation6], 0
    %12 = vsyncpa [#allocation4], 0
    // Predicated region
    $region2: #{tpu_custom_call.1} parent=1 // pred_check
      _
    $region3: #{tpu_custom_call.1} parent=1 // pred_check_branch
      %14 = sbr.rel (0) target = $region5
    $region4: #{tpu_custom_call.1} parent=1 // pred_region
      _
    $region5: #{tpu_custom_call.1} parent=1 // pred_fallthru
      _
    // Predicated region
    $region6: #{tpu_custom_call.1} parent=1 // pred_check
      _
    $region7: #{tpu_custom_call.1} parent=1 // pred_check_branch
      %16 = sbr.rel (0) target = $region9
    $region8: #{tpu_custom_call.1} parent=1 // pred_region
      _
    $region9: #{tpu_custom_call.1} parent=1 // pred_fallthru
      _
    // Predicated region
    $region10: #{tpu_custom_call.1} parent=1 // pred_check
      _
    $region11: #{tpu_custom_call.1} parent=1 // pred_check_branch
      %18 = sbr.rel (0) target = $region13
    $region12: #{tpu_custom_call.1} parent=1 // pred_region
      %s20 = ssub.s32 512, 512
      %21 = vsyncadd [#allocation3], %s20
      %s22 = sshll.u32 [#allocation2], 4
      %s23 = int_to_ptr.vmem [resolvable:$true] %s22
      %28 = dma.hbm_to_vmem [thread:$0]  %s2, 512, %s23, [#allocation3], 128, 128, 8
    $region13: #{tpu_custom_call.1} parent=1 // pred_fallthru
      _
    // Predicated region
    $region14: #{tpu_custom_call.1} parent=1 // pred_check
      _
    $region15: #{tpu_custom_call.1} parent=1 // pred_check_branch
      %30 = sbr.rel (0) target = $region17
    $region16: #{tpu_custom_call.1} parent=1 // pred_region
      %s32 = ssub.s32 16, 16
      %33 = vsyncadd [#allocation6], %s32
      %s35 = sshll.u32 [#allocation5], 4
      %s36 = int_to_ptr.vmem [resolvable:$true] %s35
      %38 = dma.hbm_to_vmem [thread:$0]  %s3, 16, %s36, [#allocation6]
    $region17: #{tpu_custom_call.1} parent=1 // pred_fallthru
      _
    // Predicated region
    $region18: #{tpu_custom_call.1} parent=1 // pred_check
      _
    $region19: #{tpu_custom_call.1} parent=1 // pred_check_branch
      %40 = sbr.rel (0) target = $region21
    $region20: #{tpu_custom_call.1} parent=1 // pred_region
      _
    $region21: #{tpu_custom_call.1} parent=1 // pred_fallthru
      _
    // Predicated region
    $region22: #{tpu_custom_call.1} parent=1 // pred_check
      _
    $region23: #{tpu_custom_call.1} parent=1 // pred_check_branch
      %42 = sbr.rel (0) target = $region25
    $region24: #{tpu_custom_call.1} parent=1 // pred_region
      %43 = dma.done [#allocation3], 512
    $region25: #{tpu_custom_call.1} parent=1 // pred_fallthru
      _
    // Predicated region
    $region26: #{tpu_custom_call.1} parent=1 // pred_check
      _
    $region27: #{tpu_custom_call.1} parent=1 // pred_check_branch
      %45 = sbr.rel (0) target = $region29
    $region28: #{tpu_custom_call.1} parent=1 // pred_region
      %46 = dma.done [#allocation6], 16
    $region29: #{tpu_custom_call.1} parent=1 // pred_fallthru
      _
    %v47 = vld [vmem:[%s1] sm:$0xff]
    %v48 = vld [vmem:[#allocation2] sm:$0xff]
    %v49 = vld [vmem:[#allocation2 + $0x8] sm:$0xff]
    %v50 = vld [vmem:[#allocation2 + $0x10] sm:$0xff]
    %v51 = vld [vmem:[#allocation2 + $0x18] sm:$0xff]
    %v52 = vld [vmem:[%s0] sm:$0xff]
    %v53 = vlaneseq
    %v54 = vand.u32 %v53, 127
    %55 = vset.pattern.permute.xlu0 0
    %56 = vperm.xlu0 %55, %v52
    %v57 = vpop.permute.xlu0 %56
    %vm58 = vcmp.eq.s32.totalorder %v57, %v54
    %v59 = vsel %vm58, 1, 0
    %v60 = vcvt.s32.f32 %v59
    %v61 = vld [vmem:[%s4] sm:$0xff]
    %v62 = vld [vmem:[%s4 + $0x8] sm:$0xff]
    %vm63 = vcmask 130048
    %v65 = vsel %vm63, %v60, 0
    %67 = vmatprep.subr.mxu0 0.0
    %68 = vmatpush1.msra.mxu0 %v61
    %69 = vmatprep.subr.mxu0 0.0
    %70 = vmatpush1.msra.mxu0 %v62
    %71 = vmatprep.subr.mxu0 0.0
    %72 = vmatpush1.msra.mxu0 0.0
    %73 = vmatprep.subr.mxu0 0.0
    %74 = vmatpush1.msra.mxu0 0.0
    %75 = vmatprep.subr.mxu0 0.0
    %76 = vmatpush1.msra.mxu0 0.0
    %77 = vmatprep.subr.mxu0 0.0
    %78 = vmatpush1.msra.mxu0 0.0
    %79 = vmatprep.subr.mxu0 0.0
    %80 = vmatpush1.msra.mxu0 0.0
    %81 = vmatprep.subr.mxu0 0.0
    %82 = vmatpush1.msra.mxu0 0.0
    %83 = vmatprep.subr.mxu0 0.0
    %84 = vmatpush1.msra.mxu0 0.0
    %85 = vmatprep.subr.mxu0 0.0
    %86 = vmatpush1.msra.mxu0 0.0
    %87 = vmatprep.subr.mxu0 0.0
    %88 = vmatpush1.msra.mxu0 0.0
    %89 = vmatprep.subr.mxu0 0.0
    %90 = vmatpush1.msra.mxu0 0.0
    %91 = vmatprep.subr.mxu0 0.0
    %92 = vmatpush1.msra.mxu0 0.0
    %93 = vmatprep.subr.mxu0 0.0
    %94 = vmatpush1.msra.mxu0 0.0
    %95 = vmatprep.subr.mxu0 0.0
    %96 = vmatpush1.msra.mxu0 0.0
    %97 = vmatprep.subr.mxu0 0.0
    %98 = vmatpush1.msra.mxu0 0.0
    %99 = vmatprep.subr.mxu0 0.0
    %100 = vmatpush1.msra.mxu0 0.0
    %101 = vmatprep.subr.mxu0 0.0
    %102 = vmatpush1.msra.mxu0 0.0
    %103 = vmatprep.subr.mxu0 0.0
    %104 = vmatpush1.msra.mxu0 0.0
    %105 = vmatprep.subr.mxu0 0.0
    %106 = vmatpush1.msra.mxu0 0.0
    %107 = vmatprep.subr.mxu0 0.0
    %108 = vmatpush1.msra.mxu0 0.0
    %109 = vmatprep.subr.mxu0 0.0
    %110 = vmatpush1.msra.mxu0 0.0
    %111 = vmatprep.subr.mxu0 0.0
    %112 = vmatpush1.msra.mxu0 0.0
    %113 = vmatprep.subr.mxu0 0.0
    %114 = vmatpush1.msra.mxu0 0.0
    %115 = vmatprep.subr.mxu0 0.0
    %116 = vmatpush1.msra.mxu0 0.0
    %117 = vmatprep.subr.mxu0 0.0
    %118 = vmatpush1.msra.mxu0 0.0
    %119 = vmatprep.subr.mxu0 0.0
    %120 = vmatpush1.msra.mxu0 0.0
    %121 = vmatprep.subr.mxu0 0.0
    %122 = vmatpush1.msra.mxu0 0.0
    %123 = vmatprep.subr.mxu0 0.0
    %124 = vmatpush1.msra.mxu0 0.0
    %125 = vmatprep.subr.mxu0 0.0
    %126 = vmatpush1.msra.mxu0 0.0
    %127 = vmatprep.subr.mxu0 0.0
    %128 = vmatpush1.msra.mxu0 0.0
    %129 = vmatprep.subr.mxu0 0.0
    %130 = vmatpush1.msra.mxu0 0.0
    %131 = vmatprep.mubr.f32.mxu0 0.0
    %132 = vmatmul.mubr.f32.gmra.mrb[0].mxu0 %v65
    %v133 = vpop.f32.mrb[0].mxu0
    %v134 = vadd.f32 0.0, %v133
    %v135 = vpop.f32.mrb[0].mxu0
    %136 = vdwg.mxu0
    %v137 = vld [vmem:[#allocation5] sm:$0x1]
    %v139 = vlaneseq
    %v140 = vshrl.u32 %v139, 7
    %v141 = vsub.s32 0, %v140
    %v142 = vrot.slane %v137, %v141
    %vm144 = vcmask 261120
    %v146 = vsel %vm144, %v47, 0
    %148 = vmatprep.subr.mxu0 0.0
    %149 = vmatpush1.msra.mxu0 %v48
    %150 = vmatprep.subr.mxu0 0.0
    %151 = vmatpush1.msra.mxu0 %v49
    %152 = vmatprep.subr.mxu0 0.0
    %153 = vmatpush1.msra.mxu0 %v50
    %154 = vmatprep.subr.mxu0 0.0
    %155 = vmatpush1.msra.mxu0 %v51
    %156 = vmatprep.subr.mxu0 0.0
    %157 = vmatpush1.msra.mxu0 0.0
    %158 = vmatprep.subr.mxu0 0.0
    %159 = vmatpush1.msra.mxu0 0.0
    %160 = vmatprep.subr.mxu0 0.0
    %161 = vmatpush1.msra.mxu0 0.0
    %162 = vmatprep.subr.mxu0 0.0
    %163 = vmatpush1.msra.mxu0 0.0
    %164 = vmatprep.subr.mxu0 0.0
    %165 = vmatpush1.msra.mxu0 0.0
    %166 = vmatprep.subr.mxu0 0.0
    %167 = vmatpush1.msra.mxu0 0.0
    %168 = vmatprep.subr.mxu0 0.0
    %169 = vmatpush1.msra.mxu0 0.0
    %170 = vmatprep.subr.mxu0 0.0
    %171 = vmatpush1.msra.mxu0 0.0
    %172 = vmatprep.subr.mxu0 0.0
    %173 = vmatpush1.msra.mxu0 0.0
    %174 = vmatprep.subr.mxu0 0.0
    %175 = vmatpush1.msra.mxu0 0.0
    %176 = vmatprep.subr.mxu0 0.0
    %177 = vmatpush1.msra.mxu0 0.0
    %178 = vmatprep.subr.mxu0 0.0
    %179 = vmatpush1.msra.mxu0 0.0
    %180 = vmatprep.subr.mxu0 0.0
    %181 = vmatpush1.msra.mxu0 0.0
    %182 = vmatprep.subr.mxu0 0.0
    %183 = vmatpush1.msra.mxu0 0.0
    %184 = vmatprep.subr.mxu0 0.0
    %185 = vmatpush1.msra.mxu0 0.0
    %186 = vmatprep.subr.mxu0 0.0
    %187 = vmatpush1.msra.mxu0 0.0
    %188 = vmatprep.subr.mxu0 0.0
    %189 = vmatpush1.msra.mxu0 0.0
    %190 = vmatprep.subr.mxu0 0.0
    %191 = vmatpush1.msra.mxu0 0.0
    %192 = vmatprep.subr.mxu0 0.0
    %193 = vmatpush1.msra.mxu0 0.0
    %194 = vmatprep.subr.mxu0 0.0
    %195 = vmatpush1.msra.mxu0 0.0
    %196 = vmatprep.subr.mxu0 0.0
    %197 = vmatpush1.msra.mxu0 0.0
    %198 = vmatprep.subr.mxu0 0.0
    %199 = vmatpush1.msra.mxu0 0.0
    %200 = vmatprep.subr.mxu0 0.0
    %201 = vmatpush1.msra.mxu0 0.0
    %202 = vmatprep.subr.mxu0 0.0
    %203 = vmatpush1.msra.mxu0 0.0
    %204 = vmatprep.subr.mxu0 0.0
    %205 = vmatpush1.msra.mxu0 0.0
    %206 = vmatprep.subr.mxu0 0.0
    %207 = vmatpush1.msra.mxu0 0.0
    %208 = vmatprep.subr.mxu0 0.0
    %209 = vmatpush1.msra.mxu0 0.0
    %210 = vmatprep.subr.mxu0 0.0
    %211 = vmatpush1.msra.mxu0 0.0
    %212 = vmatprep.mubr.f32.mxu0 0.0
    %213 = vmatmul.mubr.f32.gmra.mrb[0].mxu0 %v146
    %v214 = vpop.f32.mrb[0].mxu0
    %v215 = vadd.f32 %v142, %v214
    %v216 = vpop.f32.mrb[0].mxu0
    %217 = vdwg.mxu0
    %v218 = vmul.f32 %v134, %v215
    %219 = vst [vmem:[#allocation7] sm:$0xff] %v218
    // Predicated region
    $region30: #{tpu_custom_call.1} parent=1 // pred_check
      _
    $region31: #{tpu_custom_call.1} parent=1 // pred_check_branch
      %221 = sbr.rel (0) target = $region33
    $region32: #{tpu_custom_call.1} parent=1 // pred_region
      %s223 = ssub.s32 128, 128
      %224 = vsyncadd [#allocation4], %s223
      %s226 = sshll.u32 [#allocation7], 4
      %s227 = int_to_ptr.vmem [resolvable:$true] %s226
      %229 = dma.vmem_to_hbm [thread:$0]  %s227, 128, %s5, [#allocation4]
    $region33: #{tpu_custom_call.1} parent=1 // pred_fallthru
      _
    // Predicated region
    $region34: #{tpu_custom_call.1} parent=1 // pred_check
      _
    $region35: #{tpu_custom_call.1} parent=1 // pred_check_branch
      %231 = sbr.rel (0) target = $region37
    $region36: #{tpu_custom_call.1} parent=1 // pred_region
      %232 = dma.done [#allocation4], 128
    $region37: #{tpu_custom_call.1} parent=1 // pred_fallthru
      _
    %233 = vsyncpa [#allocation3], 1
    %234 = vsyncpa [#allocation6], 1
    %235 = vsyncpa [#allocation4], 1

</llo_original>
